<compile_context>
chip_gen: v5e
topology: v5e:2x2
jax: 0.10.0
libtpu: 0.0.40
codegen_flags: <defaults>
</compile_context>

<pallas_src>
import jax
import jax.numpy as jnp
from jax.experimental import pallas as pl
from jax.experimental.pallas import tpu as pltpu

KSIZE = 3

# Deterministic parameters from the PyTorch module's __init__.
CONV1_WEIGHT = jnp.array([-0.07021185, -0.54910874, 0.5624425], dtype=jnp.float32)
CONV1_BIAS = jnp.array([-0.42805082], dtype=jnp.float32)


def conv1d_kernel(w_ref, b_ref, x_ref, o_ref):
    # w_ref: SMEM (KSIZE,), b_ref: SMEM (1,)
    # x_ref: VMEM (TN, L + KSIZE - 1)   zero-padded input tile
    # o_ref: VMEM (TN, L)               full-width (lane-dense) output tile
    x = x_ref[...].astype(jnp.float32)
    _, lw = o_ref.shape

    # Hoist scalar reads once (avoids per-tap scalar->vreg broadcasts).
    taps = [w_ref[k] for k in range(KSIZE)]
    bias = b_ref[0]

    # Static tap slices -> pure VPU elementwise FMAs, f32 accumulate.
    acc = bias + taps[0] * x[:, 0:lw]
    for k in range(1, KSIZE):
        acc = acc + taps[k] * x[:, k:k + lw]
    o_ref[...] = acc.astype(o_ref.dtype)


def conv1d_forward(x, w=CONV1_WEIGHT, b=CONV1_BIAS):
    """Conv1d(1, 1, 3) forward.  x: (N, 1, L) float -> (N, 1, L - KSIZE + 1)."""
    n, c, l = x.shape
    assert c == 1, "Conv1d(1, 1, 3): single input/output channel"
    l_out = l - KSIZE + 1
    pad = KSIZE - 1

    # Channel dim is 1 on both sides -> 2-D (N, L) slab.
    x2 = x.reshape(n, l)
    # Zero-pad L so the kernel can write a full-width output tile; the padded
    # tail columns are sliced off below.
    x_pad = jnp.pad(x2, ((0, 0), (0, pad)))

    # Tile along N only (rows are independent -> no halo).  Target ~2 MiB per
    # input buffer so the double-buffered pipeline fits scoped VMEM on all of
    # v5e / v6e / v7x without raising vmem_limit_bytes.
    # TODO(synk): for very long L, additionally tile L with a KSIZE-1 halo.
    row_bytes = (l + pad) * x.dtype.itemsize
    tn = max(8, min(1024, (2 * 1024 * 1024) // max(row_bytes, 1)))
    tn = (tn // 8) * 8
    if n <= tn:
        tn = n  # single block covering the full array dims (always legal)
    grid = (pl.cdiv(n, tn),)

    out_full = pl.pallas_call(
        conv1d_kernel,
        out_shape=jax.ShapeDtypeStruct((n, l), x.dtype),
        grid=grid,
        in_specs=[
            pl.BlockSpec(memory_space=pltpu.MemorySpace.SMEM),   # weights (3,)
            pl.BlockSpec(memory_space=pltpu.MemorySpace.SMEM),   # bias (1,)
            pl.BlockSpec((tn, l + pad), lambda i: (i, 0)),       # input tile
        ],
        out_specs=pl.BlockSpec((tn, l), lambda i: (i, 0)),       # output tile
        compiler_params=pltpu.CompilerParams(
            # Rows are independent: lets v7x shard the N axis across both
            # TensorCores; harmless on v5e/v6e.
            dimension_semantics=("parallel",),
        ),
    )(w, b, x_pad)

    # Drop the columns produced from the zero padding.
    return out_full[:, :l_out].reshape(n, 1, l_out)


def _reference(x, w=CONV1_WEIGHT, b=CONV1_BIAS):
    n, c, l = x.shape
    l_out = l - KSIZE + 1
    xs = x.reshape(n, l)
    acc = jnp.full((n, l_out), b[0], dtype=jnp.float32)
    for k in range(KSIZE):
        acc = acc + w[k] * xs[:, k:k + l_out]
    return acc.reshape(n, 1, l_out)


if __name__ == "__main__":
    key = jax.random.PRNGKey(0)
    # Small shapes consistent with the module: batch=2, channels=1, length=16.
    x = jax.random.normal(key, (2, 1, 16), dtype=jnp.float32)

    out = conv1d_forward(x)
    out = jax.block_until_ready(out)

    ref = _reference(x)
    assert out.shape == (2, 1, 14), out.shape
    assert jnp.allclose(out, ref, atol=1e-5, rtol=1e-5), "mismatch vs reference"

    print("KERNEL_OK")
</pallas_src>

<mosaic_0001>
module attributes {stable_mosaic.version = 11 : i64} {
  func.func @conv1d_kernel(%arg0: i32, %arg1: memref<3xf32, #tpu.memory_space<smem>>, %arg2: memref<1xf32, #tpu.memory_space<smem>>, %arg3: memref<2x18xf32, #tpu.memory_space<vmem>>, %arg4: memref<2x16xf32, #tpu.memory_space<vmem>>) attributes {dimension_semantics = [#tpu.dimension_semantics<parallel>], iteration_bounds = array<i64: 1>, scalar_prefetch = 0 : i64, scratch_operands = 0 : i64, tpu.core_type = #tpu.core_type<tc>, window_params = [{transform_indices = @transform_0, window_bounds = array<i64: 3>}, {transform_indices = @transform_1, window_bounds = array<i64: 1>}, {transform_indices = @transform_2, window_bounds = array<i64: 2, 18>}, {transform_indices = @transform_3, window_bounds = array<i64: 2, 16>}]} {
    %c0 = arith.constant 0 : index
    %c0_0 = arith.constant 0 : index
    %0 = vector.load %arg3[%c0, %c0_0] : memref<2x18xf32, #tpu.memory_space<vmem>>, vector<2x18xf32>
    %c0_1 = arith.constant 0 : index
    %1 = memref.load %arg1[%c0_1] : memref<3xf32, #tpu.memory_space<smem>>
    %c1 = arith.constant 1 : index
    %2 = memref.load %arg1[%c1] : memref<3xf32, #tpu.memory_space<smem>>
    %c2 = arith.constant 2 : index
    %3 = memref.load %arg1[%c2] : memref<3xf32, #tpu.memory_space<smem>>
    %c0_2 = arith.constant 0 : index
    %4 = memref.load %arg2[%c0_2] : memref<1xf32, #tpu.memory_space<smem>>
    %5 = vector.extract_strided_slice %0 {offsets = [0, 0], sizes = [2, 16], strides = [1, 1]} : vector<2x18xf32> to vector<2x16xf32>
    %6 = vector.broadcast %1 : f32 to vector<2x16xf32>
    %7 = arith.mulf %6, %5 : vector<2x16xf32>
    %8 = vector.broadcast %4 : f32 to vector<2x16xf32>
    %9 = arith.addf %8, %7 : vector<2x16xf32>
    %10 = vector.extract_strided_slice %0 {offsets = [0, 1], sizes = [2, 16], strides = [1, 1]} : vector<2x18xf32> to vector<2x16xf32>
    %11 = vector.broadcast %2 : f32 to vector<2x16xf32>
    %12 = arith.mulf %11, %10 : vector<2x16xf32>
    %13 = arith.addf %9, %12 : vector<2x16xf32>
    %14 = vector.extract_strided_slice %0 {offsets = [0, 2], sizes = [2, 16], strides = [1, 1]} : vector<2x18xf32> to vector<2x16xf32>
    %15 = vector.broadcast %3 : f32 to vector<2x16xf32>
    %16 = arith.mulf %15, %14 : vector<2x16xf32>
    %17 = arith.addf %13, %16 : vector<2x16xf32>
    %c0_3 = arith.constant 0 : index
    %c0_4 = arith.constant 0 : index
    %18 = vector.load %arg4[%c0_3, %c0_4] : memref<2x16xf32, #tpu.memory_space<vmem>>, vector<2x16xf32>
    tpu.vector_store %arg4[%c0_3, %c0_4], %17 {strides = array<i32>} : memref<2x16xf32, #tpu.memory_space<vmem>>, vector<2x16xf32>,
    return
  }
  func.func @transform_0(%arg0: i32) -> i32 {
    %c0_i32 = arith.constant 0 : i32
    %c0_i32_0 = arith.constant 0 : i32
    return %c0_i32 : i32
  }
  func.func @transform_1(%arg0: i32) -> i32 {
    %c0_i32 = arith.constant 0 : i32
    %c0_i32_0 = arith.constant 0 : i32
    return %c0_i32 : i32
  }
  func.func @transform_2(%arg0: i32) -> (i32, i32) {
    %c0_i32 = arith.constant 0 : i32
    %c0_i32_0 = arith.constant 0 : i32
    return %arg0, %c0_i32 : i32, i32
  }
  func.func @transform_3(%arg0: i32) -> (i32, i32) {
    %c0_i32 = arith.constant 0 : i32
    %c0_i32_0 = arith.constant 0 : i32
    return %arg0, %c0_i32 : i32, i32
  }
}

</mosaic_0001>

<llo_original>
// kernel: tpu_custom_call.1
$region0: #{tpu_custom_call.1}
  #allocation0 [shape = 'u32[]', space=smem, size = 0x4, offset = 0x4, fixed_abs, tag = 'smem constant byte address 0x4 - core index']
  #allocation1 [shape = 'u32[72,128]{1,0:T(1,128)}', space=vmem, size = 0x9000, scoped, tag = 'internal scratch']
  #allocation2 [shape = 'f32[1]{0:T(128)S(6)}', space=smem, size = 0x200, scoped, tag = 'scoped memory for tpu_custom_call.1']
  %s0 = inlined_call_operand.hbm [shape: f32[3], index: 0, kind: input, shape index: {}]
  %s1 = inlined_call_operand.<no memory space> [shape: f32[1], index: 1, kind: input, shape index: {}]
  %s2 = inlined_call_operand.vmem [shape: f32[2,18], index: 2, kind: input, shape index: {}]
  %s3 = inlined_call_operand.hbm [shape: f32[2,16], index: 3, kind: output, shape index: {}]
  %s4 = sld [smem:[#allocation0]]
  $region26: #{tpu_custom_call.1} parent=0
    _
  %s6 = ssub.s32 1, %s4
  %s7 = scalar_select 0, %s6, %s4
  %8 = sst [smem:[#allocation2]] %s1
  $region1: #{tpu_custom_call.1} parent=0
    #allocation3 [shape = 'u8[512]{0}', space=smem, size = 0x200, scoped, tag = 'input window, operand 0, single buffered']
    #allocation4 [shape = 's32[1]{0}', space=sflag, size = 0x4, scoped, tag = 'scoped memory for tpu_custom_call.1']
    #allocation5 [shape = 's32[1]{0}', space=sflag, size = 0x4, scoped, tag = 'scoped memory for tpu_custom_call.1']
    #allocation6 [shape = 'u8[1024]{0}', space=vmem, size = 0x400, scoped, tag = 'output window, operand 0, single buffered']
    %9 = vsyncpa [#allocation5], 0
    %10 = vsyncpa [#allocation4], 0
    // Predicated region
    $region2: #{tpu_custom_call.1} parent=1 // pred_check
      _
    $region3: #{tpu_custom_call.1} parent=1 // pred_check_branch
      %12 = sbr.rel (0) target = $region5
    $region4: #{tpu_custom_call.1} parent=1 // pred_region
      %14 = vsyncadd [#allocation5], 0
      %s16 = sshll.u32 %s0, 4
      %s17 = int_to_ptr.hbm [resolvable:$true] %s16
      %19 = dma.hbm_to_smem %s17, 16, [#allocation3], [#allocation5]
    $region5: #{tpu_custom_call.1} parent=1 // pred_fallthru
      _
    // Predicated region
    $region6: #{tpu_custom_call.1} parent=1 // pred_check
      _
    $region7: #{tpu_custom_call.1} parent=1 // pred_check_branch
      %21 = sbr.rel (0) target = $region9
    $region8: #{tpu_custom_call.1} parent=1 // pred_region
      _
    $region9: #{tpu_custom_call.1} parent=1 // pred_fallthru
      _
    // Predicated region
    $region10: #{tpu_custom_call.1} parent=1 // pred_check
      _
    $region11: #{tpu_custom_call.1} parent=1 // pred_check_branch
      %23 = sbr.rel (0) target = $region13
    $region12: #{tpu_custom_call.1} parent=1 // pred_region
      _
    $region13: #{tpu_custom_call.1} parent=1 // pred_fallthru
      _
    // Predicated region
    $region14: #{tpu_custom_call.1} parent=1 // pred_check
      _
    $region15: #{tpu_custom_call.1} parent=1 // pred_check_branch
      %25 = sbr.rel (0) target = $region17
    $region16: #{tpu_custom_call.1} parent=1 // pred_region
      %27 = dma.done [#allocation5], 16
    $region17: #{tpu_custom_call.1} parent=1 // pred_fallthru
      _
    %28 = sfence
    %v29 = vld [vmem:[%s2] sm:$0x3]
    %s30 = sld [smem:[#allocation3]]
    %s31 = sld [smem:[#allocation3 + $0x1]]
    %s32 = sld [smem:[#allocation3 + $0x2]]
    %s33 = sld [smem:[#allocation2]]
    %v34 = vstv %s30
    %v35 = vmul.f32 %v34, %v29
    %v36 = vstv %s33
    %v37 = vadd.f32 %v36, %v35
    %v38 = vstv %s31
    %v39 = vmul.f32 %v38, %v29
    %41 = vrot.lane.b32.xlu0 %v39, 127
    %v42 = vpop.permute.xlu0 %41
    %v44 = vadd.f32 %v37, %v42
    %v45 = vstv %s32
    %v46 = vmul.f32 %v45, %v29
    %48 = vrot.lane.b32.xlu0 %v46, 126
    %v49 = vpop.permute.xlu0 %48
    %v51 = vadd.f32 %v44, %v49
    %vm52 = vcmask 123904
    %53 = vst.msk [vmem:[#allocation6] sm:$0x3] %vm52, %v51
    // Predicated region
    $region18: #{tpu_custom_call.1} parent=1 // pred_check
      _
    $region19: #{tpu_custom_call.1} parent=1 // pred_check_branch
      %55 = sbr.rel (0) target = $region21
    $region20: #{tpu_custom_call.1} parent=1 // pred_region
      %57 = vsyncadd [#allocation4], 0
      %s59 = sshll.u32 [#allocation6], 4
      %s60 = int_to_ptr.vmem [resolvable:$true] %s59
      %s61 = sshll.u32 %s3, 4
      %s62 = int_to_ptr.hbm [resolvable:$true] %s61
      %64 = dma.vmem_to_hbm [thread:$0]  %s60, 32, %s62, [#allocation4]
    $region21: #{tpu_custom_call.1} parent=1 // pred_fallthru
      _
    // Predicated region
    $region22: #{tpu_custom_call.1} parent=1 // pred_check
      _
    $region23: #{tpu_custom_call.1} parent=1 // pred_check_branch
      %66 = sbr.rel (0) target = $region25
    $region24: #{tpu_custom_call.1} parent=1 // pred_region
      %68 = dma.done [#allocation4], 32
    $region25: #{tpu_custom_call.1} parent=1 // pred_fallthru
      _
    %69 = vsyncpa [#allocation4], 1
    %70 = vsyncpa [#allocation5], 1

</llo_original>
